<compile_context>
chip_gen: v5e
topology: v5e:2x2
jax: 0.10.0
libtpu: 0.0.40
codegen_flags: <defaults>
</compile_context>

<pallas_src>
import functools

import jax
import jax.numpy as jnp
from jax import lax
from jax.experimental import pallas as pl
from jax.experimental.pallas import tpu as pltpu


def _round_up(x, m):
    return (x + m - 1) // m * m


def _tdnn_fused_kernel(x_ref, w_ref, b_ref, o_ref, *, C_pad, kW_max, t_out, specs):
    """One grid step = one tile of N = batch*seq tokens; all conv widths fused.

    x_ref: [T_pad*C_pad, n_tile]   bf16  (time-major, channels minor, N on lanes)
    w_ref: [out_pad, kW_max*C_pad] bf16  (all conv kernels packed, zero padded)
    b_ref: [out_pad, 1]            f32
    o_ref: [out_pad, n_tile]       f32
    specs: static tuple of (row_offset, out_dim, n_valid_positions) per kernel.
    """
    n_tile = x_ref.shape[1]
    out_pad = o_ref.shape[0]
    KC = kW_max * C_pad

    w = w_ref[...]                                        # tiny, stays resident

    # ---- hoisted invalid-row masks (one [out_pad,1] bool col per distinct set)
    row = lax.broadcasted_iota(jnp.int32, (out_pad, 1), 0)
    col_cache = {}
    inv_col = {}
    for t in range(t_out):
        key = tuple((off, d) for (off, d, n_valid) in specs if t >= n_valid)
        if key:
            if key not in col_cache:
                m = None
                for off, d in key:
                    cur = (row >= off) & (row < off + d)
                    m = cur if m is None else (m | cur)
                col_cache[key] = m
            inv_col[t] = col_cache[key]

    running = jnp.full((out_pad, n_tile), -jnp.inf, jnp.float32)
    for t in range(t_out):                                # small static unroll
        # Sublane-aligned contiguous window slice: [kW_max*C_pad, n_tile].
        win = x_ref[t * C_pad:t * C_pad + KC, :]
        # Single MXU matmul per time position (bf16 in, f32 accumulate).
        val = jnp.dot(w, win, preferred_element_type=jnp.float32)
        if t in inv_col:                                  # mask past-the-end windows
            val = jnp.where(inv_col[t], -jnp.inf, val)
        running = jnp.maximum(running, val)               # max-over-time

    # bias + ReLU hoisted out of the time loop; single lane-dense store.
    o_ref[...] = jnp.maximum(running + b_ref[...], 0.0)


def _tdnn_forward_impl(x, weights, biases=None, *, n_tile_target=256):
    """x: [batch, seq, max_word_len, char_embed]; weights[i]: [out_dim_i, C, kW_i]
    (PyTorch conv1d layout); biases[i]: [out_dim_i] or None.
    Returns [batch, seq, sum(out_dim_i)]."""
    B, S, T, C = x.shape
    N = B * S

    out_dims = [int(w.shape[0]) for w in weights]
    kWs = [int(w.shape[2]) for w in weights]
    kW_max, kW_min = max(kWs), min(kWs)
    assert T >= kW_max, "max_word_len must be >= widest conv kernel"

    out_sum = sum(out_dims)
    out_pad = _round_up(out_sum, 128)       # lane-dense output width
    C_pad = _round_up(C, 16)                # bf16 sublane-packing alignment
    t_out = T - kW_min + 1                  # time positions processed in-kernel
    T_pad = t_out - 1 + kW_max              # padded word length (uniform windows)
    KC = kW_max * C_pad

    # ---- pack all conv kernels into one [out_pad, kW_max*C_pad] bf16 matrix --
    w_cat = jnp.zeros((out_pad, KC), jnp.float32)
    b_col = jnp.zeros((out_pad, 1), jnp.float32)
    specs = []
    off = 0
    for i, (w, d, kW) in enumerate(zip(weights, out_dims, kWs)):
        # PyTorch conv1d weight [d, C, kW] -> [d, kW, C] -> pad C -> [d, kW*C_pad]
        wk = jnp.transpose(w.astype(jnp.float32), (0, 2, 1))
        wk = jnp.pad(wk, ((0, 0), (0, 0), (0, C_pad - C))).reshape(d, kW * C_pad)
        w_cat = w_cat.at[off:off + d, :kW * C_pad].set(wk)
        if biases is not None:
            b_col = b_col.at[off:off + d, 0].set(biases[i].astype(jnp.float32))
        specs.append((off, d, T - kW + 1))
        off += d
    w_cat = w_cat.astype(jnp.bfloat16)
    specs = tuple(specs)

    # ---- activations: [B,S,T,C] -> [T_pad*C_pad, N_pad] bf16 (single repack) -
    n_tile = min(n_tile_target, _round_up(N, 128))
    N_pad = _round_up(N, n_tile)
    x3 = x.reshape(N, T, C).astype(jnp.bfloat16)
    x3 = jnp.pad(x3, ((0, 0), (0, T_pad - T), (0, C_pad - C)))
    x2 = jnp.transpose(x3.reshape(N, T_pad * C_pad))            # [T_pad*C_pad, N]
    x2 = jnp.pad(x2, ((0, 0), (0, N_pad - N)))

    kern = functools.partial(_tdnn_fused_kernel, C_pad=C_pad, kW_max=kW_max,
                             t_out=t_out, specs=specs)
    y_pad = pl.pallas_call(
        kern,
        out_shape=jax.ShapeDtypeStruct((out_pad, N_pad), jnp.float32),
        grid=(N_pad // n_tile,),
        in_specs=[
            pl.BlockSpec((T_pad * C_pad, n_tile), lambda n: (0, n)),
            pl.BlockSpec((out_pad, KC), lambda n: (0, 0)),
            pl.BlockSpec((out_pad, 1), lambda n: (0, 0)),
        ],
        out_specs=pl.BlockSpec((out_pad, n_tile), lambda n: (0, n)),
        compiler_params=pltpu.CompilerParams(
            dimension_semantics=("parallel",)),
    )(x2, w_cat, b_col)

    y = jnp.transpose(y_pad[:out_sum, :N])      # [N, depth_sum]
    return y.reshape(B, S, out_sum)


tdnn_forward = jax.jit(_tdnn_forward_impl)


def tdnn_reference(x, weights, biases=None):
    """Pure-JAX f32 reference matching the PyTorch forward."""
    B, S, W, E = x.shape
    xf = x.reshape(-1, W, E).astype(jnp.float32)
    outs = []
    for i, w in enumerate(weights):
        out_dim, _, kW = w.shape
        t_out = W - kW + 1
        windows = jnp.stack([xf[:, t:t + kW, :] for t in range(t_out)], axis=1)
        conv = jnp.einsum("ntkc,ock->nto", windows, w.astype(jnp.float32))
        if biases is not None:
            conv = conv + biases[i].astype(jnp.float32)[None, None, :]
        conv = jnp.maximum(conv, 0.0)
        outs.append(jnp.max(conv, axis=1))      # [N, out_dim]
    return jnp.concatenate(outs, axis=1).reshape(B, S, -1)


if __name__ == "__main__":
    # Small shapes consistent with the module's forward.
    batch, seq_len, max_word_len, char_embed = 2, 4, 8, 16
    kernels = [(1, 8), (2, 16), (3, 24)]   # (width, out_dim)

    key = jax.random.PRNGKey(0)
    kx, *kws = jax.random.split(key, 1 + 2 * len(kernels))

    x = jax.random.normal(kx, (batch, seq_len, max_word_len, char_embed),
                          dtype=jnp.float32)

    # Deterministic params mirroring Tensor(out_dim, C, kW).normal_(0, 0.05).
    weights, biases = [], []
    for i, (kW, out_dim) in enumerate(kernels):
        weights.append(0.05 * jax.random.normal(
            kws[2 * i], (out_dim, char_embed, kW), dtype=jnp.float32))
        biases.append(0.05 * jax.random.normal(
            kws[2 * i + 1], (out_dim,), dtype=jnp.float32))

    depth_sum = sum(od for _, od in kernels)

    # bias=False path (module default).  bf16 matmul operands -> loose-ish tol.
    y_nobias = jax.block_until_ready(tdnn_forward(x, weights))
    y_nobias_ref = tdnn_reference(x, weights, None)
    assert y_nobias.shape == (batch, seq_len, depth_sum), y_nobias.shape
    assert jnp.allclose(y_nobias, y_nobias_ref, atol=1e-2, rtol=1e-2), \
        float(jnp.max(jnp.abs(y_nobias - y_nobias_ref)))

    # bias=True path.
    y_bias = jax.block_until_ready(tdnn_forward(x, weights, biases=biases))
    y_bias_ref = tdnn_reference(x, weights, biases)
    assert jnp.allclose(y_bias, y_bias_ref, atol=1e-2, rtol=1e-2), \
        float(jnp.max(jnp.abs(y_bias - y_bias_ref)))

    print("KERNEL_OK")
</pallas_src>

<mosaic_0001>
module attributes {stable_mosaic.version = 11 : i64} {
  func.func @_tdnn_fused_kernel(%arg0: i32, %arg1: memref<160x128xbf16, #tpu.memory_space<vmem>>, %arg2: memref<128x48xbf16, #tpu.memory_space<vmem>>, %arg3: memref<128x1xf32, #tpu.memory_space<vmem>>, %arg4: memref<128x128xf32, #tpu.memory_space<vmem>>) attributes {dimension_semantics = [#tpu.dimension_semantics<parallel>], iteration_bounds = array<i64: 1>, scalar_prefetch = 0 : i64, scratch_operands = 0 : i64, tpu.core_type = #tpu.core_type<tc>, window_params = [{transform_indices = @transform_0, window_bounds = array<i64: 160, 128>}, {pipeline_mode = #tpu.pipeline_mode<synchronous>, transform_indices = @transform_1, window_bounds = array<i64: 128, 48>}, {pipeline_mode = #tpu.pipeline_mode<synchronous>, transform_indices = @transform_2, window_bounds = array<i64: 128, 1>}, {transform_indices = @transform_3, window_bounds = array<i64: 128, 128>}]} {
    %c0 = arith.constant 0 : index
    %c0_0 = arith.constant 0 : index
    %0 = vector.load %arg2[%c0, %c0_0] : memref<128x48xbf16, #tpu.memory_space<vmem>>, vector<128x48xbf16>
    %1 = tpu.iota {dimensions = array<i32: 0>} : vector<128x1xi32>
    %c24_i32 = arith.constant 24 : i32
    %2 = vector.broadcast %c24_i32 : i32 to vector<128x1xi32>
    %3 = arith.cmpi sge, %1, %2 : vector<128x1xi32>
    %c48_i32 = arith.constant 48 : i32
    %4 = vector.broadcast %c48_i32 : i32 to vector<128x1xi32>
    %5 = arith.cmpi slt, %1, %4 : vector<128x1xi32>
    %6 = arith.andi %3, %5 : vector<128x1xi1>
    %c8_i32 = arith.constant 8 : i32
    %7 = vector.broadcast %c8_i32 : i32 to vector<128x1xi32>
    %8 = arith.cmpi sge, %1, %7 : vector<128x1xi32>
    %c24_i32_1 = arith.constant 24 : i32
    %9 = vector.broadcast %c24_i32_1 : i32 to vector<128x1xi32>
    %10 = arith.cmpi slt, %1, %9 : vector<128x1xi32>
    %11 = arith.andi %8, %10 : vector<128x1xi1>
    %c24_i32_2 = arith.constant 24 : i32
    %12 = vector.broadcast %c24_i32_2 : i32 to vector<128x1xi32>
    %13 = arith.cmpi sge, %1, %12 : vector<128x1xi32>
    %c48_i32_3 = arith.constant 48 : i32
    %14 = vector.broadcast %c48_i32_3 : i32 to vector<128x1xi32>
    %15 = arith.cmpi slt, %1, %14 : vector<128x1xi32>
    %16 = arith.andi %13, %15 : vector<128x1xi1>
    %17 = arith.ori %11, %16 : vector<128x1xi1>
    %cst = arith.constant 0xFF800000 : f32
    %18 = vector.broadcast %cst : f32 to vector<128x128xf32>
    %c0_4 = arith.constant 0 : index
    %c0_5 = arith.constant 0 : index
    %19 = vector.load %arg1[%c0_4, %c0_5] : memref<160x128xbf16, #tpu.memory_space<vmem>>, vector<48x128xbf16>
    %cst_6 = arith.constant dense<0.000000e+00> : vector<128x128xf32>
    %20 = tpu.matmul %0, %19, %cst_6 {dimension_numbers = #tpu.dot_dimension_numbers<[1], [0], [0], [1], [0, 0, 1, 1], [], []>} : vector<128x48xbf16>, vector<48x128xbf16>, vector<128x128xf32> -> vector<128x128xf32>
    %21 = arith.maximumf %18, %20 : vector<128x128xf32>
    %c16 = arith.constant 16 : index
    %c0_7 = arith.constant 0 : index
    %22 = vector.load %arg1[%c16, %c0_7] : memref<160x128xbf16, #tpu.memory_space<vmem>>, vector<48x128xbf16>
    %cst_8 = arith.constant dense<0.000000e+00> : vector<128x128xf32>
    %23 = tpu.matmul %0, %22, %cst_8 {dimension_numbers = #tpu.dot_dimension_numbers<[1], [0], [0], [1], [0, 0, 1, 1], [], []>} : vector<128x48xbf16>, vector<48x128xbf16>, vector<128x128xf32> -> vector<128x128xf32>
    %24 = arith.maximumf %21, %23 : vector<128x128xf32>
    %c32 = arith.constant 32 : index
    %c0_9 = arith.constant 0 : index
    %25 = vector.load %arg1[%c32, %c0_9] : memref<160x128xbf16, #tpu.memory_space<vmem>>, vector<48x128xbf16>
    %cst_10 = arith.constant dense<0.000000e+00> : vector<128x128xf32>
    %26 = tpu.matmul %0, %25, %cst_10 {dimension_numbers = #tpu.dot_dimension_numbers<[1], [0], [0], [1], [0, 0, 1, 1], [], []>} : vector<128x48xbf16>, vector<48x128xbf16>, vector<128x128xf32> -> vector<128x128xf32>
    %27 = arith.maximumf %24, %26 : vector<128x128xf32>
    %c48 = arith.constant 48 : index
    %c0_11 = arith.constant 0 : index
    %28 = vector.load %arg1[%c48, %c0_11] : memref<160x128xbf16, #tpu.memory_space<vmem>>, vector<48x128xbf16>
    %cst_12 = arith.constant dense<0.000000e+00> : vector<128x128xf32>
    %29 = tpu.matmul %0, %28, %cst_12 {dimension_numbers = #tpu.dot_dimension_numbers<[1], [0], [0], [1], [0, 0, 1, 1], [], []>} : vector<128x48xbf16>, vector<48x128xbf16>, vector<128x128xf32> -> vector<128x128xf32>
    %30 = arith.maximumf %27, %29 : vector<128x128xf32>
    %c64 = arith.constant 64 : index
    %c0_13 = arith.constant 0 : index
    %31 = vector.load %arg1[%c64, %c0_13] : memref<160x128xbf16, #tpu.memory_space<vmem>>, vector<48x128xbf16>
    %cst_14 = arith.constant dense<0.000000e+00> : vector<128x128xf32>
    %32 = tpu.matmul %0, %31, %cst_14 {dimension_numbers = #tpu.dot_dimension_numbers<[1], [0], [0], [1], [0, 0, 1, 1], [], []>} : vector<128x48xbf16>, vector<48x128xbf16>, vector<128x128xf32> -> vector<128x128xf32>
    %33 = arith.maximumf %30, %32 : vector<128x128xf32>
    %c80 = arith.constant 80 : index
    %c0_15 = arith.constant 0 : index
    %34 = vector.load %arg1[%c80, %c0_15] : memref<160x128xbf16, #tpu.memory_space<vmem>>, vector<48x128xbf16>
    %cst_16 = arith.constant dense<0.000000e+00> : vector<128x128xf32>
    %35 = tpu.matmul %0, %34, %cst_16 {dimension_numbers = #tpu.dot_dimension_numbers<[1], [0], [0], [1], [0, 0, 1, 1], [], []>} : vector<128x48xbf16>, vector<48x128xbf16>, vector<128x128xf32> -> vector<128x128xf32>
    %36 = arith.maximumf %33, %35 : vector<128x128xf32>
    %c96 = arith.constant 96 : index
    %c0_17 = arith.constant 0 : index
    %37 = vector.load %arg1[%c96, %c0_17] : memref<160x128xbf16, #tpu.memory_space<vmem>>, vector<48x128xbf16>
    %cst_18 = arith.constant dense<0.000000e+00> : vector<128x128xf32>
    %38 = tpu.matmul %0, %37, %cst_18 {dimension_numbers = #tpu.dot_dimension_numbers<[1], [0], [0], [1], [0, 0, 1, 1], [], []>} : vector<128x48xbf16>, vector<48x128xbf16>, vector<128x128xf32> -> vector<128x128xf32>
    %cst_19 = arith.constant 0xFF800000 : f32
    %39 = vector.shape_cast %6 : vector<128x1xi1> to vector<128x1xi1>
    %40 = vector.broadcast %39 : vector<128x1xi1> to vector<128x128xi1>
    %41 = vector.broadcast %cst_19 : f32 to vector<128x128xf32>
    %42 = arith.select %40, %41, %38 : vector<128x128xi1>, vector<128x128xf32>
    %43 = arith.maximumf %36, %42 : vector<128x128xf32>
    %c112 = arith.constant 112 : index
    %c0_20 = arith.constant 0 : index
    %44 = vector.load %arg1[%c112, %c0_20] : memref<160x128xbf16, #tpu.memory_space<vmem>>, vector<48x128xbf16>
    %cst_21 = arith.constant dense<0.000000e+00> : vector<128x128xf32>
    %45 = tpu.matmul %0, %44, %cst_21 {dimension_numbers = #tpu.dot_dimension_numbers<[1], [0], [0], [1], [0, 0, 1, 1], [], []>} : vector<128x48xbf16>, vector<48x128xbf16>, vector<128x128xf32> -> vector<128x128xf32>
    %cst_22 = arith.constant 0xFF800000 : f32
    %46 = vector.shape_cast %17 : vector<128x1xi1> to vector<128x1xi1>
    %47 = vector.broadcast %46 : vector<128x1xi1> to vector<128x128xi1>
    %48 = vector.broadcast %cst_22 : f32 to vector<128x128xf32>
    %49 = arith.select %47, %48, %45 : vector<128x128xi1>, vector<128x128xf32>
    %50 = arith.maximumf %43, %49 : vector<128x128xf32>
    %c0_23 = arith.constant 0 : index
    %c0_24 = arith.constant 0 : index
    %51 = vector.load %arg3[%c0_23, %c0_24] : memref<128x1xf32, #tpu.memory_space<vmem>>, vector<128x1xf32>
    %52 = vector.broadcast %51 : vector<128x1xf32> to vector<128x128xf32>
    %53 = arith.addf %50, %52 : vector<128x128xf32>
    %cst_25 = arith.constant 0.000000e+00 : f32
    %54 = vector.broadcast %cst_25 : f32 to vector<128x128xf32>
    %55 = arith.maximumf %53, %54 : vector<128x128xf32>
    %c0_26 = arith.constant 0 : index
    %c0_27 = arith.constant 0 : index
    %56 = vector.load %arg4[%c0_26, %c0_27] : memref<128x128xf32, #tpu.memory_space<vmem>>, vector<128x128xf32>
    tpu.vector_store %arg4[%c0_26, %c0_27], %55 {strides = array<i32>} : memref<128x128xf32, #tpu.memory_space<vmem>>, vector<128x128xf32>,
    return
  }
  func.func @transform_0(%arg0: i32) -> (i32, i32) {
    %c0_i32 = arith.constant 0 : i32
    %c0_i32_0 = arith.constant 0 : i32
    return %c0_i32, %arg0 : i32, i32
  }
  func.func @transform_1(%arg0: i32) -> (i32, i32) {
    %c0_i32 = arith.constant 0 : i32
    %c0_i32_0 = arith.constant 0 : i32
    %c0_i32_1 = arith.constant 0 : i32
    return %c0_i32, %c0_i32_0 : i32, i32
  }
  func.func @transform_2(%arg0: i32) -> (i32, i32) {
    %c0_i32 = arith.constant 0 : i32
    %c0_i32_0 = arith.constant 0 : i32
    %c0_i32_1 = arith.constant 0 : i32
    return %c0_i32, %c0_i32_0 : i32, i32
  }
  func.func @transform_3(%arg0: i32) -> (i32, i32) {
    %c0_i32 = arith.constant 0 : i32
    %c0_i32_0 = arith.constant 0 : i32
    return %c0_i32, %arg0 : i32, i32
  }
}

</mosaic_0001>

<llo_original>
// kernel: _tdnn_forward_impl.1
$region0: #{_tdnn_forward_impl.1}
  #allocation0 [shape = 'u32[]', space=smem, size = 0x4, offset = 0x4, fixed_abs, tag = 'smem constant byte address 0x4 - core index']
  #allocation1 [shape = 'u32[72,128]{1,0:T(1,128)}', space=vmem, size = 0x9000, scoped, tag = 'internal scratch']
  %s0 = inlined_call_operand.vmem [shape: bf16[160,128], index: 0, kind: input, shape index: {}]
  %s1 = inlined_call_operand.vmem [shape: bf16[128,48], index: 1, kind: input, shape index: {}]
  %s2 = inlined_call_operand.vmem [shape: f32[128,1], index: 2, kind: input, shape index: {}]
  %s3 = inlined_call_operand.vmem [shape: f32[128,128], index: 3, kind: output, shape index: {}]
  %s4 = sld [smem:[#allocation0]]
  $region22: #{_tdnn_forward_impl.1} parent=0
    _
  %s6 = ssub.s32 1, %s4
  %s7 = scalar_select 0, %s6, %s4
  // Predicated region
  $region2: #{_tdnn_forward_impl.1} parent=0 // pred_check
    _
  $region3: #{_tdnn_forward_impl.1} parent=0 // pred_check_branch
    %9 = sbr.rel (0) target = $region5
  $region4: #{_tdnn_forward_impl.1} parent=0 // pred_region
    _
  $region5: #{_tdnn_forward_impl.1} parent=0 // pred_fallthru
    _
  // Predicated region
  $region6: #{_tdnn_forward_impl.1} parent=0 // pred_check
    _
  $region7: #{_tdnn_forward_impl.1} parent=0 // pred_check_branch
    %11 = sbr.rel (0) target = $region9
  $region8: #{_tdnn_forward_impl.1} parent=0 // pred_region
    _
  $region9: #{_tdnn_forward_impl.1} parent=0 // pred_fallthru
    _
  // Predicated region
  $region10: #{_tdnn_forward_impl.1} parent=0 // pred_check
    _
  $region11: #{_tdnn_forward_impl.1} parent=0 // pred_check_branch
    %13 = sbr.rel (0) target = $region13
  $region12: #{_tdnn_forward_impl.1} parent=0 // pred_region
    _
  $region13: #{_tdnn_forward_impl.1} parent=0 // pred_fallthru
    _
  %v15 = vld [vmem:[%s1] sm:$0xf]
  %v16 = vld [vmem:[%s1 + $0x4] sm:$0xf]
  %v17 = vld [vmem:[%s1 + $0x8] sm:$0xf]
  %v18 = vld [vmem:[%s1 + $0xc] sm:$0xf]
  %v19 = vld [vmem:[%s1 + $0x10] sm:$0xf]
  %v20 = vld [vmem:[%s1 + $0x14] sm:$0xf]
  %v21 = vld [vmem:[%s1 + $0x18] sm:$0xf]
  %v22 = vld [vmem:[%s1 + $0x1c] sm:$0xf]
  %v23 = vld [vmem:[%s1 + $0x20] sm:$0xf]
  %v24 = vld [vmem:[%s1 + $0x24] sm:$0xf]
  %v25 = vld [vmem:[%s1 + $0x28] sm:$0xf]
  %v26 = vld [vmem:[%s1 + $0x2c] sm:$0xf]
  %v27 = vld [vmem:[%s1 + $0x30] sm:$0xf]
  %v28 = vld [vmem:[%s1 + $0x34] sm:$0xf]
  %v29 = vld [vmem:[%s1 + $0x38] sm:$0xf]
  %v30 = vld [vmem:[%s1 + $0x3c] sm:$0xf]
  %v31 = vlaneseq
  %v32 = vshrl.u32 %v31, 7
  %v33 = vadd.s32 %v32, 8
  %v34 = vadd.s32 %v32, 16
  %v35 = vadd.s32 %v32, 24
  %v36 = vadd.s32 %v32, 32
  %v37 = vadd.s32 %v32, 40
  %v38 = vadd.s32 %v32, 48
  %v39 = vadd.s32 %v32, 56
  %v40 = vadd.s32 %v32, 64
  %v41 = vadd.s32 %v32, 72
  %v42 = vadd.s32 %v32, 80
  %v43 = vadd.s32 %v32, 88
  %v44 = vadd.s32 %v32, 96
  %v45 = vadd.s32 %v32, 104
  %v46 = vadd.s32 %v32, 112
  %v47 = vadd.s32 %v32, 120
  %vm48 = vcmp.ge.s32.totalorder %v32, 24
  %vm49 = vcmp.ge.s32.totalorder %v33, 24
  %vm50 = vcmp.ge.s32.totalorder %v34, 24
  %vm51 = vcmp.ge.s32.totalorder %v35, 24
  %vm52 = vcmp.ge.s32.totalorder %v36, 24
  %vm53 = vcmp.ge.s32.totalorder %v37, 24
  %vm54 = vcmp.ge.s32.totalorder %v38, 24
  %vm55 = vcmp.ge.s32.totalorder %v39, 24
  %vm56 = vcmp.ge.s32.totalorder %v40, 24
  %vm57 = vcmp.ge.s32.totalorder %v41, 24
  %vm58 = vcmp.ge.s32.totalorder %v42, 24
  %vm59 = vcmp.ge.s32.totalorder %v43, 24
  %vm60 = vcmp.ge.s32.totalorder %v44, 24
  %vm61 = vcmp.ge.s32.totalorder %v45, 24
  %vm62 = vcmp.ge.s32.totalorder %v46, 24
  %vm63 = vcmp.ge.s32.totalorder %v47, 24
  %vm64 = vcmp.lt.s32.totalorder %v32, 48
  %vm65 = vcmp.lt.s32.totalorder %v33, 48
  %vm66 = vcmp.lt.s32.totalorder %v34, 48
  %vm67 = vcmp.lt.s32.totalorder %v35, 48
  %vm68 = vcmp.lt.s32.totalorder %v36, 48
  %vm69 = vcmp.lt.s32.totalorder %v37, 48
  %vm70 = vcmp.lt.s32.totalorder %v38, 48
  %vm71 = vcmp.lt.s32.totalorder %v39, 48
  %vm72 = vcmp.lt.s32.totalorder %v40, 48
  %vm73 = vcmp.lt.s32.totalorder %v41, 48
  %vm74 = vcmp.lt.s32.totalorder %v42, 48
  %vm75 = vcmp.lt.s32.totalorder %v43, 48
  %vm76 = vcmp.lt.s32.totalorder %v44, 48
  %vm77 = vcmp.lt.s32.totalorder %v45, 48
  %vm78 = vcmp.lt.s32.totalorder %v46, 48
  %vm79 = vcmp.lt.s32.totalorder %v47, 48
  %vm80 = vmand %vm48, %vm64
  %vm81 = vmand %vm49, %vm65
  %vm82 = vmand %vm50, %vm66
  %vm83 = vmand %vm51, %vm67
  %vm84 = vmand %vm52, %vm68
  %vm85 = vmand %vm53, %vm69
  %vm86 = vmand %vm54, %vm70
  %vm87 = vmand %vm55, %vm71
  %vm88 = vmand %vm56, %vm72
  %vm89 = vmand %vm57, %vm73
  %vm90 = vmand %vm58, %vm74
  %vm91 = vmand %vm59, %vm75
  %vm92 = vmand %vm60, %vm76
  %vm93 = vmand %vm61, %vm77
  %vm94 = vmand %vm62, %vm78
  %vm95 = vmand %vm63, %vm79
  %vm96 = vcmp.ge.s32.totalorder %v32, 8
  %vm97 = vcmp.ge.s32.totalorder %v33, 8
  %vm98 = vcmp.ge.s32.totalorder %v34, 8
  %vm99 = vcmp.ge.s32.totalorder %v35, 8
  %vm100 = vcmp.ge.s32.totalorder %v36, 8
  %vm101 = vcmp.ge.s32.totalorder %v37, 8
  %vm102 = vcmp.ge.s32.totalorder %v38, 8
  %vm103 = vcmp.ge.s32.totalorder %v39, 8
  %vm104 = vcmp.ge.s32.totalorder %v40, 8
  %vm105 = vcmp.ge.s32.totalorder %v41, 8
  %vm106 = vcmp.ge.s32.totalorder %v42, 8
  %vm107 = vcmp.ge.s32.totalorder %v43, 8
  %vm108 = vcmp.ge.s32.totalorder %v44, 8
  %vm109 = vcmp.ge.s32.totalorder %v45, 8
  %vm110 = vcmp.ge.s32.totalorder %v46, 8
  %vm111 = vcmp.ge.s32.totalorder %v47, 8
  %vm112 = vcmp.lt.s32.totalorder %v32, 24
  %vm113 = vcmp.lt.s32.totalorder %v33, 24
  %vm114 = vcmp.lt.s32.totalorder %v34, 24
  %vm115 = vcmp.lt.s32.totalorder %v35, 24
  %vm116 = vcmp.lt.s32.totalorder %v36, 24
  %vm117 = vcmp.lt.s32.totalorder %v37, 24
  %vm118 = vcmp.lt.s32.totalorder %v38, 24
  %vm119 = vcmp.lt.s32.totalorder %v39, 24
  %vm120 = vcmp.lt.s32.totalorder %v40, 24
  %vm121 = vcmp.lt.s32.totalorder %v41, 24
  %vm122 = vcmp.lt.s32.totalorder %v42, 24
  %vm123 = vcmp.lt.s32.totalorder %v43, 24
  %vm124 = vcmp.lt.s32.totalorder %v44, 24
  %vm125 = vcmp.lt.s32.totalorder %v45, 24
  %vm126 = vcmp.lt.s32.totalorder %v46, 24
  %vm127 = vcmp.lt.s32.totalorder %v47, 24
  %vm128 = vmand %vm96, %vm112
  %vm129 = vmand %vm97, %vm113
  %vm130 = vmand %vm98, %vm114
  %vm131 = vmand %vm99, %vm115
  %vm132 = vmand %vm100, %vm116
  %vm133 = vmand %vm101, %vm117
  %vm134 = vmand %vm102, %vm118
  %vm135 = vmand %vm103, %vm119
  %vm136 = vmand %vm104, %vm120
  %vm137 = vmand %vm105, %vm121
  %vm138 = vmand %vm106, %vm122
  %vm139 = vmand %vm107, %vm123
  %vm140 = vmand %vm108, %vm124
  %vm141 = vmand %vm109, %vm125
  %vm142 = vmand %vm110, %vm126
  %vm143 = vmand %vm111, %vm127
  %vm144 = vmor %vm128, %vm80
  %vm145 = vmor %vm129, %vm81
  %vm146 = vmor %vm130, %vm82
  %vm147 = vmor %vm131, %vm83
  %vm148 = vmor %vm132, %vm84
  %vm149 = vmor %vm133, %vm85
  %vm150 = vmor %vm134, %vm86
  %vm151 = vmor %vm135, %vm87
  %vm152 = vmor %vm136, %vm88
  %vm153 = vmor %vm137, %vm89
  %vm154 = vmor %vm138, %vm90
  %vm155 = vmor %vm139, %vm91
  %vm156 = vmor %vm140, %vm92
  %vm157 = vmor %vm141, %vm93
  %vm158 = vmor %vm142, %vm94
  %vm159 = vmor %vm143, %vm95
  %v160 = vld [vmem:[%s0] sm:$0xf]
  %v161 = vld [vmem:[%s0 + $0x4] sm:$0xf]
  %v162 = vld [vmem:[%s0 + $0x8] sm:$0xf]
  %v163 = vld [vmem:[%s0 + $0xc] sm:$0xf]
  %v164 = vld [vmem:[%s0 + $0x10] sm:$0xf]
  %v165 = vld [vmem:[%s0 + $0x14] sm:$0xf]
  %v182 = vunpack.c.l.b16 %v15
  %v183 = vunpack.c.l.b16 %v16
  %v184 = vunpack.c.l.b16 %v17
  %v185 = vunpack.c.l.b16 %v18
  %v186 = vunpack.c.l.b16 %v19
  %v187 = vunpack.c.l.b16 %v20
  %v188 = vunpack.c.l.b16 %v21
  %v189 = vunpack.c.l.b16 %v22
  %v190 = vunpack.c.l.b16 %v23
  %v191 = vunpack.c.l.b16 %v24
  %v192 = vunpack.c.l.b16 %v25
  %v193 = vunpack.c.l.b16 %v26
  %v194 = vunpack.c.l.b16 %v27
  %v195 = vunpack.c.l.b16 %v28
  %v196 = vunpack.c.l.b16 %v29
  %v197 = vunpack.c.l.b16 %v30
  %v198 = vpack.c.b16 %v183, %v182
  %v199 = vpack.c.b16 %v185, %v184
  %v200 = vpack.c.b16 %v187, %v186
  %v201 = vpack.c.b16 %v189, %v188
  %v202 = vpack.c.b16 %v191, %v190
  %v203 = vpack.c.b16 %v193, %v192
  %v204 = vpack.c.b16 %v195, %v194
  %v205 = vpack.c.b16 %v197, %v196
  %v212 = vunpack.c.l.b16 %v160
  %v213 = vunpack.c.l.b16 %v161
  %v214 = vunpack.c.l.b16 %v162
  %v215 = vunpack.c.l.b16 %v163
  %v216 = vunpack.c.l.b16 %v164
  %v217 = vunpack.c.l.b16 %v165
  %v218 = vpack.c.b16 %v213, %v212
  %v219 = vpack.c.b16 %v215, %v214
  %v220 = vpack.c.b16 %v217, %v216
  %vm224 = vcmask 392192
  %v226 = vsel %vm224, %v198, 0
  %v229 = vsel %vm224, %v199, 0
  %v232 = vsel %vm224, %v200, 0
  %v235 = vsel %vm224, %v201, 0
  %v238 = vsel %vm224, %v202, 0
  %v241 = vsel %vm224, %v203, 0
  %v244 = vsel %vm224, %v204, 0
  %v247 = vsel %vm224, %v205, 0
  %249 = vmatpush.bf16.msra.mxu0 0
  %250 = vmatpush.bf16.msra.mxu0 0
  %251 = vmatpush.bf16.msra.mxu0 0
  %252 = vmatpush.bf16.msra.mxu0 0
  %253 = vmatpush.bf16.msra.mxu0 0
  %254 = vmatpush.bf16.msra.mxu0 %v220
  %255 = vmatpush.bf16.msra.mxu0 %v219
  %256 = vmatpush.bf16.msra.mxu0 %v218
  %257 = vmatmul.bf16.gmra.mxu0 %v226
  %v258 = vpop.f32.mrf.mxu0
  %v259 = vadd.f32 0.0, %v258
  %v260 = vpop.f32.mrf.mxu0
  %v261 = vadd.f32 0.0, %v260
  %262 = vmatmul.bf16.gmra.mxu0 %v229
  %v263 = vpop.f32.mrf.mxu0
  %v264 = vadd.f32 0.0, %v263
  %v265 = vpop.f32.mrf.mxu0
  %v266 = vadd.f32 0.0, %v265
  %267 = vmatmul.bf16.gmra.mxu0 %v232
  %v268 = vpop.f32.mrf.mxu0
  %v269 = vadd.f32 0.0, %v268
  %v270 = vpop.f32.mrf.mxu0
  %v271 = vadd.f32 0.0, %v270
  %272 = vmatmul.bf16.gmra.mxu0 %v235
  %v273 = vpop.f32.mrf.mxu0
  %v274 = vadd.f32 0.0, %v273
  %v275 = vpop.f32.mrf.mxu0
  %v276 = vadd.f32 0.0, %v275
  %277 = vmatmul.bf16.gmra.mxu0 %v238
  %v278 = vpop.f32.mrf.mxu0
  %v279 = vadd.f32 0.0, %v278
  %v280 = vpop.f32.mrf.mxu0
  %v281 = vadd.f32 0.0, %v280
  %282 = vmatmul.bf16.gmra.mxu0 %v241
  %v283 = vpop.f32.mrf.mxu0
  %v284 = vadd.f32 0.0, %v283
  %v285 = vpop.f32.mrf.mxu0
  %v286 = vadd.f32 0.0, %v285
  %287 = vmatmul.bf16.gmra.mxu0 %v244
  %v288 = vpop.f32.mrf.mxu0
  %v289 = vadd.f32 0.0, %v288
  %v290 = vpop.f32.mrf.mxu0
  %v291 = vadd.f32 0.0, %v290
  %292 = vmatmul.bf16.gmra.mxu0 %v247
  %v293 = vpop.f32.mrf.mxu0
  %v294 = vadd.f32 0.0, %v293
  %v295 = vpop.f32.mrf.mxu0
  %v296 = vadd.f32 0.0, %v295
  %297 = vdwg.mxu0
  %v298 = vld [vmem:[%s0 + $0x8] sm:$0xf]
  %v299 = vld [vmem:[%s0 + $0xc] sm:$0xf]
  %v300 = vld [vmem:[%s0 + $0x10] sm:$0xf]
  %v301 = vld [vmem:[%s0 + $0x14] sm:$0xf]
  %v302 = vld [vmem:[%s0 + $0x18] sm:$0xf]
  %v303 = vld [vmem:[%s0 + $0x1c] sm:$0xf]
  %v310 = vunpack.c.l.b16 %v298
  %v311 = vunpack.c.l.b16 %v299
  %v312 = vunpack.c.l.b16 %v300
  %v313 = vunpack.c.l.b16 %v301
  %v314 = vunpack.c.l.b16 %v302
  %v315 = vunpack.c.l.b16 %v303
  %v316 = vpack.c.b16 %v311, %v310
  %v317 = vpack.c.b16 %v313, %v312
  %v318 = vpack.c.b16 %v315, %v314
  %322 = vmatpush.bf16.msra.mxu0 0
  %323 = vmatpush.bf16.msra.mxu0 0
  %324 = vmatpush.bf16.msra.mxu0 0
  %325 = vmatpush.bf16.msra.mxu0 0
  %326 = vmatpush.bf16.msra.mxu0 0
  %327 = vmatpush.bf16.msra.mxu0 %v318
  %328 = vmatpush.bf16.msra.mxu0 %v317
  %329 = vmatpush.bf16.msra.mxu0 %v316
  %330 = vmatmul.bf16.gmra.mxu0 %v226
  %v331 = vpop.f32.mrf.mxu0
  %v332 = vadd.f32 0.0, %v331
  %v333 = vpop.f32.mrf.mxu0
  %v334 = vadd.f32 0.0, %v333
  %335 = vmatmul.bf16.gmra.mxu0 %v229
  %v336 = vpop.f32.mrf.mxu0
  %v337 = vadd.f32 0.0, %v336
  %v338 = vpop.f32.mrf.mxu0
  %v339 = vadd.f32 0.0, %v338
  %340 = vmatmul.bf16.gmra.mxu0 %v232
  %v341 = vpop.f32.mrf.mxu0
  %v342 = vadd.f32 0.0, %v341
  %v343 = vpop.f32.mrf.mxu0
  %v344 = vadd.f32 0.0, %v343
  %345 = vmatmul.bf16.gmra.mxu0 %v235
  %v346 = vpop.f32.mrf.mxu0
  %v347 = vadd.f32 0.0, %v346
  %v348 = vpop.f32.mrf.mxu0
  %v349 = vadd.f32 0.0, %v348
  %350 = vmatmul.bf16.gmra.mxu0 %v238
  %v351 = vpop.f32.mrf.mxu0
  %v352 = vadd.f32 0.0, %v351
  %v353 = vpop.f32.mrf.mxu0
  %v354 = vadd.f32 0.0, %v353
  %355 = vmatmul.bf16.gmra.mxu0 %v241
  %v356 = vpop.f32.mrf.mxu0
  %v357 = vadd.f32 0.0, %v356
  %v358 = vpop.f32.mrf.mxu0
  %v359 = vadd.f32 0.0, %v358
  %360 = vmatmul.bf16.gmra.mxu0 %v244
  %v361 = vpop.f32.mrf.mxu0
  %v362 = vadd.f32 0.0, %v361
  %v363 = vpop.f32.mrf.mxu0
  %v364 = vadd.f32 0.0, %v363
  %365 = vmatmul.bf16.gmra.mxu0 %v247
  %v366 = vpop.f32.mrf.mxu0
  %v367 = vadd.f32 0.0, %v366
  %v368 = vpop.f32.mrf.mxu0
  %v369 = vadd.f32 0.0, %v368
  %370 = vdwg.mxu0
  %v371 = vmax.f32 %v259, %v332
  %v372 = vmax.f32 %v261, %v334
  %v373 = vmax.f32 %v264, %v337
  %v374 = vmax.f32 %v266, %v339
  %v375 = vmax.f32 %v269, %v342
  %v376 = vmax.f32 %v271, %v344
  %v377 = vmax.f32 %v274, %v347
  %v378 = vmax.f32 %v276, %v349
  %v379 = vmax.f32 %v279, %v352
  %v380 = vmax.f32 %v281, %v354
  %v381 = vmax.f32 %v284, %v357
  %v382 = vmax.f32 %v286, %v359
  %v383 = vmax.f32 %v289, %v362
  %v384 = vmax.f32 %v291, %v364
  %v385 = vmax.f32 %v294, %v367
  %v386 = vmax.f32 %v296, %v369
  %v387 = vld [vmem:[%s0 + $0x10] sm:$0xf]
  %v388 = vld [vmem:[%s0 + $0x14] sm:$0xf]
  %v389 = vld [vmem:[%s0 + $0x18] sm:$0xf]
  %v390 = vld [vmem:[%s0 + $0x1c] sm:$0xf]
  %v391 = vld [vmem:[%s0 + $0x20] sm:$0xf]
  %v392 = vld [vmem:[%s0 + $0x24] sm:$0xf]
  %v399 = vunpack.c.l.b16 %v387
  %v400 = vunpack.c.l.b16 %v388
  %v401 = vunpack.c.l.b16 %v389
  %v402 = vunpack.c.l.b16 %v390
  %v403 = vunpack.c.l.b16 %v391
  %v404 = vunpack.c.l.b16 %v392
  %v405 = vpack.c.b16 %v400, %v399
  %v406 = vpack.c.b16 %v402, %v401
  %v407 = vpack.c.b16 %v404, %v403
  %411 = vmatpush.bf16.msra.mxu0 0
  %412 = vmatpush.bf16.msra.mxu0 0
  %413 = vmatpush.bf16.msra.mxu0 0
  %414 = vmatpush.bf16.msra.mxu0 0
  %415 = vmatpush.bf16.msra.mxu0 0
  %416 = vmatpush.bf16.msra.mxu0 %v407
  %417 = vmatpush.bf16.msra.mxu0 %v406
  %418 = vmatpush.bf16.msra.mxu0 %v405
  %419 = vmatmul.bf16.gmra.mxu0 %v226
  %v420 = vpop.f32.mrf.mxu0
  %v421 = vadd.f32 0.0, %v420
  %v422 = vpop.f32.mrf.mxu0
  %v423 = vadd.f32 0.0, %v422
  %424 = vmatmul.bf16.gmra.mxu0 %v229
  %v425 = vpop.f32.mrf.mxu0
  %v426 = vadd.f32 0.0, %v425
  %v427 = vpop.f32.mrf.mxu0
  %v428 = vadd.f32 0.0, %v427
  %429 = vmatmul.bf16.gmra.mxu0 %v232
  %v430 = vpop.f32.mrf.mxu0
  %v431 = vadd.f32 0.0, %v430
  %v432 = vpop.f32.mrf.mxu0
  %v433 = vadd.f32 0.0, %v432
  %434 = vmatmul.bf16.gmra.mxu0 %v235
  %v435 = vpop.f32.mrf.mxu0
  %v436 = vadd.f32 0.0, %v435
  %v437 = vpop.f32.mrf.mxu0
  %v438 = vadd.f32 0.0, %v437
  %439 = vmatmul.bf16.gmra.mxu0 %v238
  %v440 = vpop.f32.mrf.mxu0
  %v441 = vadd.f32 0.0, %v440
  %v442 = vpop.f32.mrf.mxu0
  %v443 = vadd.f32 0.0, %v442
  %444 = vmatmul.bf16.gmra.mxu0 %v241
  %v445 = vpop.f32.mrf.mxu0
  %v446 = vadd.f32 0.0, %v445
  %v447 = vpop.f32.mrf.mxu0
  %v448 = vadd.f32 0.0, %v447
  %449 = vmatmul.bf16.gmra.mxu0 %v244
  %v450 = vpop.f32.mrf.mxu0
  %v451 = vadd.f32 0.0, %v450
  %v452 = vpop.f32.mrf.mxu0
  %v453 = vadd.f32 0.0, %v452
  %454 = vmatmul.bf16.gmra.mxu0 %v247
  %v455 = vpop.f32.mrf.mxu0
  %v456 = vadd.f32 0.0, %v455
  %v457 = vpop.f32.mrf.mxu0
  %v458 = vadd.f32 0.0, %v457
  %459 = vdwg.mxu0
  %v460 = vmax.f32 %v371, %v421
  %v461 = vmax.f32 %v372, %v423
  %v462 = vmax.f32 %v373, %v426
  %v463 = vmax.f32 %v374, %v428
  %v464 = vmax.f32 %v375, %v431
  %v465 = vmax.f32 %v376, %v433
  %v466 = vmax.f32 %v377, %v436
  %v467 = vmax.f32 %v378, %v438
  %v468 = vmax.f32 %v379, %v441
  %v469 = vmax.f32 %v380, %v443
  %v470 = vmax.f32 %v381, %v446
  %v471 = vmax.f32 %v382, %v448
  %v472 = vmax.f32 %v383, %v451
  %v473 = vmax.f32 %v384, %v453
  %v474 = vmax.f32 %v385, %v456
  %v475 = vmax.f32 %v386, %v458
  %v476 = vld [vmem:[%s0 + $0x18] sm:$0xf]
  %v477 = vld [vmem:[%s0 + $0x1c] sm:$0xf]
  %v478 = vld [vmem:[%s0 + $0x20] sm:$0xf]
  %v479 = vld [vmem:[%s0 + $0x24] sm:$0xf]
  %v480 = vld [vmem:[%s0 + $0x28] sm:$0xf]
  %v481 = vld [vmem:[%s0 + $0x2c] sm:$0xf]
  %v488 = vunpack.c.l.b16 %v476
  %v489 = vunpack.c.l.b16 %v477
  %v490 = vunpack.c.l.b16 %v478
  %v491 = vunpack.c.l.b16 %v479
  %v492 = vunpack.c.l.b16 %v480
  %v493 = vunpack.c.l.b16 %v481
  %v494 = vpack.c.b16 %v489, %v488
  %v495 = vpack.c.b16 %v491, %v490
  %v496 = vpack.c.b16 %v493, %v492
  %500 = vmatpush.bf16.msra.mxu0 0
  %501 = vmatpush.bf16.msra.mxu0 0
  %502 = vmatpush.bf16.msra.mxu0 0
  %503 = vmatpush.bf16.msra.mxu0 0
  %504 = vmatpush.bf16.msra.mxu0 0
  %505 = vmatpush.bf16.msra.mxu0 %v496
  %506 = vmatpush.bf16.msra.mxu0 %v495
  %507 = vmatpush.bf16.msra.mxu0 %v494
  %508 = vmatmul.bf16.gmra.mxu0 %v226
  %v509 = vpop.f32.mrf.mxu0
  %v510 = vadd.f32 0.0, %v509
  %v511 = vpop.f32.mrf.mxu0
  %v512 = vadd.f32 0.0, %v511
  %513 = vmatmul.bf16.gmra.mxu0 %v229
  %v514 = vpop.f32.mrf.mxu0
  %v515 = vadd.f32 0.0, %v514
  %v516 = vpop.f32.mrf.mxu0
  %v517 = vadd.f32 0.0, %v516
  %518 = vmatmul.bf16.gmra.mxu0 %v232
  %v519 = vpop.f32.mrf.mxu0
  %v520 = vadd.f32 0.0, %v519
  %v521 = vpop.f32.mrf.mxu0
  %v522 = vadd.f32 0.0, %v521
  %523 = vmatmul.bf16.gmra.mxu0 %v235
  %v524 = vpop.f32.mrf.mxu0
  %v525 = vadd.f32 0.0, %v524
  %v526 = vpop.f32.mrf.mxu0
  %v527 = vadd.f32 0.0, %v526
  %528 = vmatmul.bf16.gmra.mxu0 %v238
  %v529 = vpop.f32.mrf.mxu0
  %v530 = vadd.f32 0.0, %v529
  %v531 = vpop.f32.mrf.mxu0
  %v532 = vadd.f32 0.0, %v531
  %533 = vmatmul.bf16.gmra.mxu0 %v241
  %v534 = vpop.f32.mrf.mxu0
  %v535 = vadd.f32 0.0, %v534
  %v536 = vpop.f32.mrf.mxu0
  %v537 = vadd.f32 0.0, %v536
  %538 = vmatmul.bf16.gmra.mxu0 %v244
  %v539 = vpop.f32.mrf.mxu0
  %v540 = vadd.f32 0.0, %v539
  %v541 = vpop.f32.mrf.mxu0
  %v542 = vadd.f32 0.0, %v541
  %543 = vmatmul.bf16.gmra.mxu0 %v247
  %v544 = vpop.f32.mrf.mxu0
  %v545 = vadd.f32 0.0, %v544
  %v546 = vpop.f32.mrf.mxu0
  %v547 = vadd.f32 0.0, %v546
  %548 = vdwg.mxu0
  %v549 = vmax.f32 %v460, %v510
  %v550 = vmax.f32 %v461, %v512
  %v551 = vmax.f32 %v462, %v515
  %v552 = vmax.f32 %v463, %v517
  %v553 = vmax.f32 %v464, %v520
  %v554 = vmax.f32 %v465, %v522
  %v555 = vmax.f32 %v466, %v525
  %v556 = vmax.f32 %v467, %v527
  %v557 = vmax.f32 %v468, %v530
  %v558 = vmax.f32 %v469, %v532
  %v559 = vmax.f32 %v470, %v535
  %v560 = vmax.f32 %v471, %v537
  %v561 = vmax.f32 %v472, %v540
  %v562 = vmax.f32 %v473, %v542
  %v563 = vmax.f32 %v474, %v545
  %v564 = vmax.f32 %v475, %v547
  %v565 = vld [vmem:[%s0 + $0x20] sm:$0xf]
  %v566 = vld [vmem:[%s0 + $0x24] sm:$0xf]
  %v567 = vld [vmem:[%s0 + $0x28] sm:$0xf]
  %v568 = vld [vmem:[%s0 + $0x2c] sm:$0xf]
  %v569 = vld [vmem:[%s0 + $0x30] sm:$0xf]
  %v570 = vld [vmem:[%s0 + $0x34] sm:$0xf]
  %v577 = vunpack.c.l.b16 %v565
  %v578 = vunpack.c.l.b16 %v566
  %v579 = vunpack.c.l.b16 %v567
  %v580 = vunpack.c.l.b16 %v568
  %v581 = vunpack.c.l.b16 %v569
  %v582 = vunpack.c.l.b16 %v570
  %v583 = vpack.c.b16 %v578, %v577
  %v584 = vpack.c.b16 %v580, %v579
  %v585 = vpack.c.b16 %v582, %v581
  %589 = vmatpush.bf16.msra.mxu0 0
  %590 = vmatpush.bf16.msra.mxu0 0
  %591 = vmatpush.bf16.msra.mxu0 0
  %592 = vmatpush.bf16.msra.mxu0 0
  %593 = vmatpush.bf16.msra.mxu0 0
  %594 = vmatpush.bf16.msra.mxu0 %v585
  %595 = vmatpush.bf16.msra.mxu0 %v584
  %596 = vmatpush.bf16.msra.mxu0 %v583
  %597 = vmatmul.bf16.gmra.mxu0 %v226
  %v598 = vpop.f32.mrf.mxu0
  %v599 = vadd.f32 0.0, %v598
  %v600 = vpop.f32.mrf.mxu0
  %v601 = vadd.f32 0.0, %v600
  %602 = vmatmul.bf16.gmra.mxu0 %v229
  %v603 = vpop.f32.mrf.mxu0
  %v604 = vadd.f32 0.0, %v603
  %v605 = vpop.f32.mrf.mxu0
  %v606 = vadd.f32 0.0, %v605
  %607 = vmatmul.bf16.gmra.mxu0 %v232
  %v608 = vpop.f32.mrf.mxu0
  %v609 = vadd.f32 0.0, %v608
  %v610 = vpop.f32.mrf.mxu0
  %v611 = vadd.f32 0.0, %v610
  %612 = vmatmul.bf16.gmra.mxu0 %v235
  %v613 = vpop.f32.mrf.mxu0
  %v614 = vadd.f32 0.0, %v613
  %v615 = vpop.f32.mrf.mxu0
  %v616 = vadd.f32 0.0, %v615
  %617 = vmatmul.bf16.gmra.mxu0 %v238
  %v618 = vpop.f32.mrf.mxu0
  %v619 = vadd.f32 0.0, %v618
  %v620 = vpop.f32.mrf.mxu0
  %v621 = vadd.f32 0.0, %v620
  %622 = vmatmul.bf16.gmra.mxu0 %v241
  %v623 = vpop.f32.mrf.mxu0
  %v624 = vadd.f32 0.0, %v623
  %v625 = vpop.f32.mrf.mxu0
  %v626 = vadd.f32 0.0, %v625
  %627 = vmatmul.bf16.gmra.mxu0 %v244
  %v628 = vpop.f32.mrf.mxu0
  %v629 = vadd.f32 0.0, %v628
  %v630 = vpop.f32.mrf.mxu0
  %v631 = vadd.f32 0.0, %v630
  %632 = vmatmul.bf16.gmra.mxu0 %v247
  %v633 = vpop.f32.mrf.mxu0
  %v634 = vadd.f32 0.0, %v633
  %v635 = vpop.f32.mrf.mxu0
  %v636 = vadd.f32 0.0, %v635
  %637 = vdwg.mxu0
  %v638 = vmax.f32 %v549, %v599
  %v639 = vmax.f32 %v550, %v601
  %v640 = vmax.f32 %v551, %v604
  %v641 = vmax.f32 %v552, %v606
  %v642 = vmax.f32 %v553, %v609
  %v643 = vmax.f32 %v554, %v611
  %v644 = vmax.f32 %v555, %v614
  %v645 = vmax.f32 %v556, %v616
  %v646 = vmax.f32 %v557, %v619
  %v647 = vmax.f32 %v558, %v621
  %v648 = vmax.f32 %v559, %v624
  %v649 = vmax.f32 %v560, %v626
  %v650 = vmax.f32 %v561, %v629
  %v651 = vmax.f32 %v562, %v631
  %v652 = vmax.f32 %v563, %v634
  %v653 = vmax.f32 %v564, %v636
  %v654 = vld [vmem:[%s0 + $0x28] sm:$0xf]
  %v655 = vld [vmem:[%s0 + $0x2c] sm:$0xf]
  %v656 = vld [vmem:[%s0 + $0x30] sm:$0xf]
  %v657 = vld [vmem:[%s0 + $0x34] sm:$0xf]
  %v658 = vld [vmem:[%s0 + $0x38] sm:$0xf]
  %v659 = vld [vmem:[%s0 + $0x3c] sm:$0xf]
  %v666 = vunpack.c.l.b16 %v654
  %v667 = vunpack.c.l.b16 %v655
  %v668 = vunpack.c.l.b16 %v656
  %v669 = vunpack.c.l.b16 %v657
  %v670 = vunpack.c.l.b16 %v658
  %v671 = vunpack.c.l.b16 %v659
  %v672 = vpack.c.b16 %v667, %v666
  %v673 = vpack.c.b16 %v669, %v668
  %v674 = vpack.c.b16 %v671, %v670
  %678 = vmatpush.bf16.msra.mxu0 0
  %679 = vmatpush.bf16.msra.mxu0 0
  %680 = vmatpush.bf16.msra.mxu0 0
  %681 = vmatpush.bf16.msra.mxu0 0
  %682 = vmatpush.bf16.msra.mxu0 0
  %683 = vmatpush.bf16.msra.mxu0 %v674
  %684 = vmatpush.bf16.msra.mxu0 %v673
  %685 = vmatpush.bf16.msra.mxu0 %v672
  %686 = vmatmul.bf16.gmra.mxu0 %v226
  %v687 = vpop.f32.mrf.mxu0
  %v688 = vadd.f32 0.0, %v687
  %v689 = vpop.f32.mrf.mxu0
  %v690 = vadd.f32 0.0, %v689
  %691 = vmatmul.bf16.gmra.mxu0 %v229
  %v692 = vpop.f32.mrf.mxu0
  %v693 = vadd.f32 0.0, %v692
  %v694 = vpop.f32.mrf.mxu0
  %v695 = vadd.f32 0.0, %v694
  %696 = vmatmul.bf16.gmra.mxu0 %v232
  %v697 = vpop.f32.mrf.mxu0
  %v698 = vadd.f32 0.0, %v697
  %v699 = vpop.f32.mrf.mxu0
  %v700 = vadd.f32 0.0, %v699
  %701 = vmatmul.bf16.gmra.mxu0 %v235
  %v702 = vpop.f32.mrf.mxu0
  %v703 = vadd.f32 0.0, %v702
  %v704 = vpop.f32.mrf.mxu0
  %v705 = vadd.f32 0.0, %v704
  %706 = vmatmul.bf16.gmra.mxu0 %v238
  %v707 = vpop.f32.mrf.mxu0
  %v708 = vadd.f32 0.0, %v707
  %v709 = vpop.f32.mrf.mxu0
  %v710 = vadd.f32 0.0, %v709
  %711 = vmatmul.bf16.gmra.mxu0 %v241
  %v712 = vpop.f32.mrf.mxu0
  %v713 = vadd.f32 0.0, %v712
  %v714 = vpop.f32.mrf.mxu0
  %v715 = vadd.f32 0.0, %v714
  %716 = vmatmul.bf16.gmra.mxu0 %v244
  %v717 = vpop.f32.mrf.mxu0
  %v718 = vadd.f32 0.0, %v717
  %v719 = vpop.f32.mrf.mxu0
  %v720 = vadd.f32 0.0, %v719
  %721 = vmatmul.bf16.gmra.mxu0 %v247
  %v722 = vpop.f32.mrf.mxu0
  %v723 = vadd.f32 0.0, %v722
  %v724 = vpop.f32.mrf.mxu0
  %v725 = vadd.f32 0.0, %v724
  %726 = vdwg.mxu0
  %v727 = vmax.f32 %v638, %v688
  %v728 = vmax.f32 %v639, %v690
  %v729 = vmax.f32 %v640, %v693
  %v730 = vmax.f32 %v641, %v695
  %v731 = vmax.f32 %v642, %v698
  %v732 = vmax.f32 %v643, %v700
  %v733 = vmax.f32 %v644, %v703
  %v734 = vmax.f32 %v645, %v705
  %v735 = vmax.f32 %v646, %v708
  %v736 = vmax.f32 %v647, %v710
  %v737 = vmax.f32 %v648, %v713
  %v738 = vmax.f32 %v649, %v715
  %v739 = vmax.f32 %v650, %v718
  %v740 = vmax.f32 %v651, %v720
  %v741 = vmax.f32 %v652, %v723
  %v742 = vmax.f32 %v653, %v725
  %v743 = vld [vmem:[%s0 + $0x30] sm:$0xf]
  %v744 = vld [vmem:[%s0 + $0x34] sm:$0xf]
  %v745 = vld [vmem:[%s0 + $0x38] sm:$0xf]
  %v746 = vld [vmem:[%s0 + $0x3c] sm:$0xf]
  %v747 = vld [vmem:[%s0 + $0x40] sm:$0xf]
  %v748 = vld [vmem:[%s0 + $0x44] sm:$0xf]
  %v755 = vunpack.c.l.b16 %v743
  %v756 = vunpack.c.l.b16 %v744
  %v757 = vunpack.c.l.b16 %v745
  %v758 = vunpack.c.l.b16 %v746
  %v759 = vunpack.c.l.b16 %v747
  %v760 = vunpack.c.l.b16 %v748
  %v761 = vpack.c.b16 %v756, %v755
  %v762 = vpack.c.b16 %v758, %v757
  %v763 = vpack.c.b16 %v760, %v759
  %767 = vmatpush.bf16.msra.mxu0 0
  %768 = vmatpush.bf16.msra.mxu0 0
  %769 = vmatpush.bf16.msra.mxu0 0
  %770 = vmatpush.bf16.msra.mxu0 0
  %771 = vmatpush.bf16.msra.mxu0 0
  %772 = vmatpush.bf16.msra.mxu0 %v763
  %773 = vmatpush.bf16.msra.mxu0 %v762
  %774 = vmatpush.bf16.msra.mxu0 %v761
  %775 = vmatmul.bf16.gmra.mxu0 %v226
  %v776 = vpop.f32.mrf.mxu0
  %v777 = vadd.f32 0.0, %v776
  %v778 = vpop.f32.mrf.mxu0
  %v779 = vadd.f32 0.0, %v778
  %780 = vmatmul.bf16.gmra.mxu0 %v229
  %v781 = vpop.f32.mrf.mxu0
  %v782 = vadd.f32 0.0, %v781
  %v783 = vpop.f32.mrf.mxu0
  %v784 = vadd.f32 0.0, %v783
  %785 = vmatmul.bf16.gmra.mxu0 %v232
  %v786 = vpop.f32.mrf.mxu0
  %v787 = vadd.f32 0.0, %v786
  %v788 = vpop.f32.mrf.mxu0
  %v789 = vadd.f32 0.0, %v788
  %790 = vmatmul.bf16.gmra.mxu0 %v235
  %v791 = vpop.f32.mrf.mxu0
  %v792 = vadd.f32 0.0, %v791
  %v793 = vpop.f32.mrf.mxu0
  %v794 = vadd.f32 0.0, %v793
  %795 = vmatmul.bf16.gmra.mxu0 %v238
  %v796 = vpop.f32.mrf.mxu0
  %v797 = vadd.f32 0.0, %v796
  %v798 = vpop.f32.mrf.mxu0
  %v799 = vadd.f32 0.0, %v798
  %800 = vmatmul.bf16.gmra.mxu0 %v241
  %v801 = vpop.f32.mrf.mxu0
  %v802 = vadd.f32 0.0, %v801
  %v803 = vpop.f32.mrf.mxu0
  %v804 = vadd.f32 0.0, %v803
  %805 = vmatmul.bf16.gmra.mxu0 %v244
  %v806 = vpop.f32.mrf.mxu0
  %v807 = vadd.f32 0.0, %v806
  %v808 = vpop.f32.mrf.mxu0
  %v809 = vadd.f32 0.0, %v808
  %810 = vmatmul.bf16.gmra.mxu0 %v247
  %v811 = vpop.f32.mrf.mxu0
  %v812 = vadd.f32 0.0, %v811
  %v813 = vpop.f32.mrf.mxu0
  %v814 = vadd.f32 0.0, %v813
  %815 = vdwg.mxu0
  %v816 = vsel %vm80, 1, 0
  %v817 = vsel %vm81, 1, 0
  %v818 = vsel %vm82, 1, 0
  %v819 = vsel %vm83, 1, 0
  %v820 = vsel %vm84, 1, 0
  %v821 = vsel %vm85, 1, 0
  %v822 = vsel %vm86, 1, 0
  %v823 = vsel %vm87, 1, 0
  %v824 = vsel %vm88, 1, 0
  %v825 = vsel %vm89, 1, 0
  %v826 = vsel %vm90, 1, 0
  %v827 = vsel %vm91, 1, 0
  %v828 = vsel %vm92, 1, 0
  %v829 = vsel %vm93, 1, 0
  %v830 = vsel %vm94, 1, 0
  %v831 = vsel %vm95, 1, 0
  %vm832 = vcmp.eq.s32.totalorder %v816, 1
  %vm833 = vcmp.eq.s32.totalorder %v817, 1
  %vm834 = vcmp.eq.s32.totalorder %v818, 1
  %vm835 = vcmp.eq.s32.totalorder %v819, 1
  %vm836 = vcmp.eq.s32.totalorder %v820, 1
  %vm837 = vcmp.eq.s32.totalorder %v821, 1
  %vm838 = vcmp.eq.s32.totalorder %v822, 1
  %vm839 = vcmp.eq.s32.totalorder %v823, 1
  %vm840 = vcmp.eq.s32.totalorder %v824, 1
  %vm841 = vcmp.eq.s32.totalorder %v825, 1
  %vm842 = vcmp.eq.s32.totalorder %v826, 1
  %vm843 = vcmp.eq.s32.totalorder %v827, 1
  %vm844 = vcmp.eq.s32.totalorder %v828, 1
  %vm845 = vcmp.eq.s32.totalorder %v829, 1
  %vm846 = vcmp.eq.s32.totalorder %v830, 1
  %vm847 = vcmp.eq.s32.totalorder %v831, 1
  %v848 = vsel %vm832, -inf, %v777
  %v849 = vsel %vm833, -inf, %v779
  %v850 = vsel %vm834, -inf, %v782
  %v851 = vsel %vm835, -inf, %v784
  %v852 = vsel %vm836, -inf, %v787
  %v853 = vsel %vm837, -inf, %v789
  %v854 = vsel %vm838, -inf, %v792
  %v855 = vsel %vm839, -inf, %v794
  %v856 = vsel %vm840, -inf, %v797
  %v857 = vsel %vm841, -inf, %v799
  %v858 = vsel %vm842, -inf, %v802
  %v859 = vsel %vm843, -inf, %v804
  %v860 = vsel %vm844, -inf, %v807
  %v861 = vsel %vm845, -inf, %v809
  %v862 = vsel %vm846, -inf, %v812
  %v863 = vsel %vm847, -inf, %v814
  %v864 = vmax.f32 %v727, %v848
  %v865 = vmax.f32 %v728, %v849
  %v866 = vmax.f32 %v729, %v850
  %v867 = vmax.f32 %v730, %v851
  %v868 = vmax.f32 %v731, %v852
  %v869 = vmax.f32 %v732, %v853
  %v870 = vmax.f32 %v733, %v854
  %v871 = vmax.f32 %v734, %v855
  %v872 = vmax.f32 %v735, %v856
  %v873 = vmax.f32 %v736, %v857
  %v874 = vmax.f32 %v737, %v858
  %v875 = vmax.f32 %v738, %v859
  %v876 = vmax.f32 %v739, %v860
  %v877 = vmax.f32 %v740, %v861
  %v878 = vmax.f32 %v741, %v862
  %v879 = vmax.f32 %v742, %v863
  %v880 = vld [vmem:[%s0 + $0x38] sm:$0xf]
  %v881 = vld [vmem:[%s0 + $0x3c] sm:$0xf]
  %v882 = vld [vmem:[%s0 + $0x40] sm:$0xf]
  %v883 = vld [vmem:[%s0 + $0x44] sm:$0xf]
  %v884 = vld [vmem:[%s0 + $0x48] sm:$0xf]
  %v885 = vld [vmem:[%s0 + $0x4c] sm:$0xf]
  %v892 = vunpack.c.l.b16 %v880
  %v893 = vunpack.c.l.b16 %v881
  %v894 = vunpack.c.l.b16 %v882
  %v895 = vunpack.c.l.b16 %v883
  %v896 = vunpack.c.l.b16 %v884
  %v897 = vunpack.c.l.b16 %v885
  %v898 = vpack.c.b16 %v893, %v892
  %v899 = vpack.c.b16 %v895, %v894
  %v900 = vpack.c.b16 %v897, %v896
  %904 = vmatpush.bf16.msra.mxu0 0
  %905 = vmatpush.bf16.msra.mxu0 0
  %906 = vmatpush.bf16.msra.mxu0 0
  %907 = vmatpush.bf16.msra.mxu0 0
  %908 = vmatpush.bf16.msra.mxu0 0
  %909 = vmatpush.bf16.msra.mxu0 %v900
  %910 = vmatpush.bf16.msra.mxu0 %v899
  %911 = vmatpush.bf16.msra.mxu0 %v898
  %912 = vmatmul.bf16.gmra.mxu0 %v226
  %v913 = vpop.f32.mrf.mxu0
  %v914 = vadd.f32 0.0, %v913
  %v915 = vpop.f32.mrf.mxu0
  %v916 = vadd.f32 0.0, %v915
  %917 = vmatmul.bf16.gmra.mxu0 %v229
  %v918 = vpop.f32.mrf.mxu0
  %v919 = vadd.f32 0.0, %v918
  %v920 = vpop.f32.mrf.mxu0
  %v921 = vadd.f32 0.0, %v920
  %922 = vmatmul.bf16.gmra.mxu0 %v232
  %v923 = vpop.f32.mrf.mxu0
  %v924 = vadd.f32 0.0, %v923
  %v925 = vpop.f32.mrf.mxu0
  %v926 = vadd.f32 0.0, %v925
  %927 = vmatmul.bf16.gmra.mxu0 %v235
  %v928 = vpop.f32.mrf.mxu0
  %v929 = vadd.f32 0.0, %v928
  %v930 = vpop.f32.mrf.mxu0
  %v931 = vadd.f32 0.0, %v930
  %932 = vmatmul.bf16.gmra.mxu0 %v238
  %v933 = vpop.f32.mrf.mxu0
  %v934 = vadd.f32 0.0, %v933
  %v935 = vpop.f32.mrf.mxu0
  %v936 = vadd.f32 0.0, %v935
  %937 = vmatmul.bf16.gmra.mxu0 %v241
  %v938 = vpop.f32.mrf.mxu0
  %v939 = vadd.f32 0.0, %v938
  %v940 = vpop.f32.mrf.mxu0
  %v941 = vadd.f32 0.0, %v940
  %942 = vmatmul.bf16.gmra.mxu0 %v244
  %v943 = vpop.f32.mrf.mxu0
  %v944 = vadd.f32 0.0, %v943
  %v945 = vpop.f32.mrf.mxu0
  %v946 = vadd.f32 0.0, %v945
  %947 = vmatmul.bf16.gmra.mxu0 %v247
  %v948 = vpop.f32.mrf.mxu0
  %v949 = vadd.f32 0.0, %v948
  %v950 = vpop.f32.mrf.mxu0
  %v951 = vadd.f32 0.0, %v950
  %952 = vdwg.mxu0
  %v953 = vsel %vm144, 1, 0
  %v954 = vsel %vm145, 1, 0
  %v955 = vsel %vm146, 1, 0
  %v956 = vsel %vm147, 1, 0
  %v957 = vsel %vm148, 1, 0
  %v958 = vsel %vm149, 1, 0
  %v959 = vsel %vm150, 1, 0
  %v960 = vsel %vm151, 1, 0
  %v961 = vsel %vm152, 1, 0
  %v962 = vsel %vm153, 1, 0
  %v963 = vsel %vm154, 1, 0
  %v964 = vsel %vm155, 1, 0
  %v965 = vsel %vm156, 1, 0
  %v966 = vsel %vm157, 1, 0
  %v967 = vsel %vm158, 1, 0
  %v968 = vsel %vm159, 1, 0
  %vm969 = vcmp.eq.s32.totalorder %v953, 1
  %vm970 = vcmp.eq.s32.totalorder %v954, 1
  %vm971 = vcmp.eq.s32.totalorder %v955, 1
  %vm972 = vcmp.eq.s32.totalorder %v956, 1
  %vm973 = vcmp.eq.s32.totalorder %v957, 1
  %vm974 = vcmp.eq.s32.totalorder %v958, 1
  %vm975 = vcmp.eq.s32.totalorder %v959, 1
  %vm976 = vcmp.eq.s32.totalorder %v960, 1
  %vm977 = vcmp.eq.s32.totalorder %v961, 1
  %vm978 = vcmp.eq.s32.totalorder %v962, 1
  %vm979 = vcmp.eq.s32.totalorder %v963, 1
  %vm980 = vcmp.eq.s32.totalorder %v964, 1
  %vm981 = vcmp.eq.s32.totalorder %v965, 1
  %vm982 = vcmp.eq.s32.totalorder %v966, 1
  %vm983 = vcmp.eq.s32.totalorder %v967, 1
  %vm984 = vcmp.eq.s32.totalorder %v968, 1
  %v985 = vsel %vm969, -inf, %v914
  %v986 = vsel %vm970, -inf, %v916
  %v987 = vsel %vm971, -inf, %v919
  %v988 = vsel %vm972, -inf, %v921
  %v989 = vsel %vm973, -inf, %v924
  %v990 = vsel %vm974, -inf, %v926
  %v991 = vsel %vm975, -inf, %v929
  %v992 = vsel %vm976, -inf, %v931
  %v993 = vsel %vm977, -inf, %v934
  %v994 = vsel %vm978, -inf, %v936
  %v995 = vsel %vm979, -inf, %v939
  %v996 = vsel %vm980, -inf, %v941
  %v997 = vsel %vm981, -inf, %v944
  %v998 = vsel %vm982, -inf, %v946
  %v999 = vsel %vm983, -inf, %v949
  %v1000 = vsel %vm984, -inf, %v951
  %v1001 = vmax.f32 %v864, %v985
  %v1002 = vmax.f32 %v865, %v986
  %v1003 = vmax.f32 %v866, %v987
  %v1004 = vmax.f32 %v867, %v988
  %v1005 = vmax.f32 %v868, %v989
  %v1006 = vmax.f32 %v869, %v990
  %v1007 = vmax.f32 %v870, %v991
  %v1008 = vmax.f32 %v871, %v992
  %v1009 = vmax.f32 %v872, %v993
  %v1010 = vmax.f32 %v873, %v994
  %v1011 = vmax.f32 %v874, %v995
  %v1012 = vmax.f32 %v875, %v996
  %v1013 = vmax.f32 %v876, %v997
  %v1014 = vmax.f32 %v877, %v998
  %v1015 = vmax.f32 %v878, %v999
  %v1016 = vmax.f32 %v879, %v1000
  %v1017 = vld [vmem:[%s2] sm:$0xff]
  %v1018 = vld [vmem:[%s2 + $0x8] sm:$0xff]
  %v1019 = vld [vmem:[%s2 + $0x10] sm:$0xff]
  %v1020 = vld [vmem:[%s2 + $0x18] sm:$0xff]
  %v1021 = vld [vmem:[%s2 + $0x20] sm:$0xff]
  %v1022 = vld [vmem:[%s2 + $0x28] sm:$0xff]
  %v1023 = vld [vmem:[%s2 + $0x30] sm:$0xff]
  %v1024 = vld [vmem:[%s2 + $0x38] sm:$0xff]
  %v1025 = vld [vmem:[%s2 + $0x40] sm:$0xff]
  %v1026 = vld [vmem:[%s2 + $0x48] sm:$0xff]
  %v1027 = vld [vmem:[%s2 + $0x50] sm:$0xff]
  %v1028 = vld [vmem:[%s2 + $0x58] sm:$0xff]
  %v1029 = vld [vmem:[%s2 + $0x60] sm:$0xff]
  %v1030 = vld [vmem:[%s2 + $0x68] sm:$0xff]
  %v1031 = vld [vmem:[%s2 + $0x70] sm:$0xff]
  %v1032 = vld [vmem:[%s2 + $0x78] sm:$0xff]
  %1034 = vset.pattern.permute.xlu0 0
  %1035 = vperm.xlu0 %1034, %v1017
  %v1036 = vpop.permute.xlu0 %1035
  %1039 = vset.pattern.permute.xlu0 0
  %1040 = vperm.xlu0 %1039, %v1018
  %v1041 = vpop.permute.xlu0 %1040
  %1044 = vset.pattern.permute.xlu0 0
  %1045 = vperm.xlu0 %1044, %v1019
  %v1046 = vpop.permute.xlu0 %1045
  %1049 = vset.pattern.permute.xlu0 0
  %1050 = vperm.xlu0 %1049, %v1020
  %v1051 = vpop.permute.xlu0 %1050
  %1054 = vset.pattern.permute.xlu0 0
  %1055 = vperm.xlu0 %1054, %v1021
  %v1056 = vpop.permute.xlu0 %1055
  %1059 = vset.pattern.permute.xlu0 0
  %1060 = vperm.xlu0 %1059, %v1022
  %v1061 = vpop.permute.xlu0 %1060
  %1064 = vset.pattern.permute.xlu0 0
  %1065 = vperm.xlu0 %1064, %v1023
  %v1066 = vpop.permute.xlu0 %1065
  %1069 = vset.pattern.permute.xlu0 0
  %1070 = vperm.xlu0 %1069, %v1024
  %v1071 = vpop.permute.xlu0 %1070
  %1074 = vset.pattern.permute.xlu0 0
  %1075 = vperm.xlu0 %1074, %v1025
  %v1076 = vpop.permute.xlu0 %1075
  %1079 = vset.pattern.permute.xlu0 0
  %1080 = vperm.xlu0 %1079, %v1026
  %v1081 = vpop.permute.xlu0 %1080
  %1084 = vset.pattern.permute.xlu0 0
  %1085 = vperm.xlu0 %1084, %v1027
  %v1086 = vpop.permute.xlu0 %1085
  %1089 = vset.pattern.permute.xlu0 0
  %1090 = vperm.xlu0 %1089, %v1028
  %v1091 = vpop.permute.xlu0 %1090
  %1094 = vset.pattern.permute.xlu0 0
  %1095 = vperm.xlu0 %1094, %v1029
  %v1096 = vpop.permute.xlu0 %1095
  %1099 = vset.pattern.permute.xlu0 0
  %1100 = vperm.xlu0 %1099, %v1030
  %v1101 = vpop.permute.xlu0 %1100
  %1104 = vset.pattern.permute.xlu0 0
  %1105 = vperm.xlu0 %1104, %v1031
  %v1106 = vpop.permute.xlu0 %1105
  %1109 = vset.pattern.permute.xlu0 0
  %1110 = vperm.xlu0 %1109, %v1032
  %v1111 = vpop.permute.xlu0 %1110
  %v1113 = vadd.f32 %v1001, %v1036
  %v1114 = vadd.f32 %v1002, %v1041
  %v1115 = vadd.f32 %v1003, %v1046
  %v1116 = vadd.f32 %v1004, %v1051
  %v1117 = vadd.f32 %v1005, %v1056
  %v1118 = vadd.f32 %v1006, %v1061
  %v1119 = vadd.f32 %v1007, %v1066
  %v1120 = vadd.f32 %v1008, %v1071
  %v1121 = vadd.f32 %v1009, %v1076
  %v1122 = vadd.f32 %v1010, %v1081
  %v1123 = vadd.f32 %v1011, %v1086
  %v1124 = vadd.f32 %v1012, %v1091
  %v1125 = vadd.f32 %v1013, %v1096
  %v1126 = vadd.f32 %v1014, %v1101
  %v1127 = vadd.f32 %v1015, %v1106
  %v1128 = vadd.f32 %v1016, %v1111
  %v1129 = vmax.f32 %v1113, 0.0
  %v1130 = vmax.f32 %v1114, 0.0
  %v1131 = vmax.f32 %v1115, 0.0
  %v1132 = vmax.f32 %v1116, 0.0
  %v1133 = vmax.f32 %v1117, 0.0
  %v1134 = vmax.f32 %v1118, 0.0
  %v1135 = vmax.f32 %v1119, 0.0
  %v1136 = vmax.f32 %v1120, 0.0
  %v1137 = vmax.f32 %v1121, 0.0
  %v1138 = vmax.f32 %v1122, 0.0
  %v1139 = vmax.f32 %v1123, 0.0
  %v1140 = vmax.f32 %v1124, 0.0
  %v1141 = vmax.f32 %v1125, 0.0
  %v1142 = vmax.f32 %v1126, 0.0
  %v1143 = vmax.f32 %v1127, 0.0
  %v1144 = vmax.f32 %v1128, 0.0
  %1145 = vst [vmem:[%s3] sm:$0xff] %v1129
  %1146 = vst [vmem:[%s3 + $0x8] sm:$0xff] %v1130
  %1147 = vst [vmem:[%s3 + $0x10] sm:$0xff] %v1131
  %1148 = vst [vmem:[%s3 + $0x18] sm:$0xff] %v1132
  %1149 = vst [vmem:[%s3 + $0x20] sm:$0xff] %v1133
  %1150 = vst [vmem:[%s3 + $0x28] sm:$0xff] %v1134
  %1151 = vst [vmem:[%s3 + $0x30] sm:$0xff] %v1135
  %1152 = vst [vmem:[%s3 + $0x38] sm:$0xff] %v1136
  %1153 = vst [vmem:[%s3 + $0x40] sm:$0xff] %v1137
  %1154 = vst [vmem:[%s3 + $0x48] sm:$0xff] %v1138
  %1155 = vst [vmem:[%s3 + $0x50] sm:$0xff] %v1139
  %1156 = vst [vmem:[%s3 + $0x58] sm:$0xff] %v1140
  %1157 = vst [vmem:[%s3 + $0x60] sm:$0xff] %v1141
  %1158 = vst [vmem:[%s3 + $0x68] sm:$0xff] %v1142
  %1159 = vst [vmem:[%s3 + $0x70] sm:$0xff] %v1143
  %1160 = vst [vmem:[%s3 + $0x78] sm:$0xff] %v1144
  // Predicated region
  $region14: #{_tdnn_forward_impl.1} parent=0 // pred_check
    _
  $region15: #{_tdnn_forward_impl.1} parent=0 // pred_check_branch
    %1162 = sbr.rel (0) target = $region17
  $region16: #{_tdnn_forward_impl.1} parent=0 // pred_region
    _
  $region17: #{_tdnn_forward_impl.1} parent=0 // pred_fallthru
    _
  // Predicated region
  $region18: #{_tdnn_forward_impl.1} parent=0 // pred_check
    _
  $region19: #{_tdnn_forward_impl.1} parent=0 // pred_check_branch
    %1164 = sbr.rel (0) target = $region21
  $region20: #{_tdnn_forward_impl.1} parent=0 // pred_region
    _
  $region21: #{_tdnn_forward_impl.1} parent=0 // pred_fallthru
    _

</llo_original>
